<compile_context>
chip_gen: v6e
topology: v6e:2x2x1
jax: 0.10.0
libtpu: 0.0.40
codegen_flags: <defaults>
</compile_context>

<pallas_src>
import functools
import numpy as np

import jax
import jax.numpy as jnp
from jax import lax
from jax.experimental import pallas as pl
from jax.experimental.pallas import tpu as pltpu


@functools.lru_cache(maxsize=None)
def _vmem_limit_bytes():
    """Generation-aware scoped VMEM limit: ~75% of physical VMEM, capped at 100 MB.

    -> ~96 MB on 128-MiB parts (v5e/v6e), 48 MB on v7x's 64 MiB per-TC VMEM.
    """
    cap = 64 * 1024 * 1024
    try:
        info = pltpu.get_tpu_info()
        cap = int(getattr(info, "vmem_capacity_bytes", cap))
    except Exception:
        pass
    return int(min(cap * 3 // 4, 100 * 1024 * 1024))


# ----------------------------------------------------------------------------
# Pallas kernels
# ----------------------------------------------------------------------------

def _mlp_kernel(xT_ref, w1t_ref, b1_ref, w2_ref, b2_ref, o_ref):
    """F(x) = W2 @ tanh(W1 @ x + b1) + b2   (eq. 1/2/3 of the MLP docstring).

    Column-major ("lane-dense") layout: x tile is [f_in, tile_n], hidden activations
    are [hid, tile_n] (tile_n on the 128-lane axis), and the f_out == 1 second layer
    is a VPU multiply + sublane (XLU) reduce producing a (1, tile_n) row stored
    directly — no relayout before the store.
    """
    h = jnp.tanh(
        jnp.dot(w1t_ref[...], xT_ref[...], preferred_element_type=jnp.float32)
        + b1_ref[...]
    )                                                          # [hid, tile_n]
    out = jnp.sum(h * w2_ref[...], axis=0, keepdims=True) + b2_ref[...]  # [1, tile_n]
    o_ref[...] = out.astype(o_ref.dtype)


def mlp_pallas(xT, w1, b1, w2, b2, tile_n=4096):
    """xT: [f_in, n] -> [n].  Column-tiled, lane-dense throughout, no pad pass."""
    f_in, n = xT.shape
    hid = w1.shape[1]
    w1t = jnp.transpose(w1)            # [hid, f_in]
    b1c = b1.reshape(hid, 1)           # [hid, 1]  (broadcasts over lanes)
    w2c = w2.reshape(hid, 1)           # [hid, 1]
    b2c = b2.reshape(1, 1)

    tile = n if n <= tile_n else tile_n          # full-dim block when n is small
    num_tiles = pl.cdiv(n, tile)                 # ragged last block handled by Pallas

    # TODO(synk): for very large graphs, fuse the sender/receiver row gather into
    # this kernel via PrefetchScalarGridSpec + pl.Element row-gather BlockSpecs so
    # the [f_in, n_edge*n_pred] witness tensor never hits HBM.
    out = pl.pallas_call(
        _mlp_kernel,
        out_shape=jax.ShapeDtypeStruct((1, n), jnp.float32),
        grid=(num_tiles,),
        in_specs=[
            pl.BlockSpec((f_in, tile), lambda i: (0, i)),
            pl.BlockSpec((hid, f_in), lambda i: (0, 0)),
            pl.BlockSpec((hid, 1), lambda i: (0, 0)),
            pl.BlockSpec((hid, 1), lambda i: (0, 0)),
            pl.BlockSpec((1, 1), lambda i: (0, 0)),
        ],
        out_specs=pl.BlockSpec((1, tile), lambda i: (0, i)),
        compiler_params=pltpu.CompilerParams(
            dimension_semantics=("parallel",)),
    )(xT, w1t, b1c, w2c, b2c)
    return out[0]


def _diffusion_kernel(t_ref, x_ref, o_ref, state_sc):
    """Multichannel diffusion: channel c = obs @ T^(c+1)  (n_node on lanes).

    Grid iterates channels; T and observations are resident (constant block index,
    fetched once); the running state lives in a VMEM scratch and the per-channel
    output block write-back pipelines behind the next channel's matmul.
    """
    c = pl.program_id(0)

    @pl.when(c == 0)
    def _():
        state_sc[...] = x_ref[...]

    x_new = jnp.dot(state_sc[...], t_ref[...], preferred_element_type=jnp.float32)
    state_sc[...] = x_new
    o_ref[0] = x_new


def multichannel_diffusion_pallas(trans, node_obs, n_channels):
    """trans: [n_node, n_node] transition matrix (rows = senders),
    node_obs: [traj, n_node].  Returns [n_channels, traj, n_node]."""
    traj, n_node = node_obs.shape
    # TODO(synk): at n_node >= ~4-5k (f32 T no longer fits v7x VMEM), tile T over the
    # receiver (lane) axis with a second grid dim and/or store T in bf16; if traj is
    # large, additionally split traj into "parallel" row tiles for the second v7x TC.
    return pl.pallas_call(
        _diffusion_kernel,
        out_shape=jax.ShapeDtypeStruct((n_channels, traj, n_node), jnp.float32),
        grid=(n_channels,),
        in_specs=[
            pl.BlockSpec((n_node, n_node), lambda c: (0, 0)),
            pl.BlockSpec((traj, n_node), lambda c: (0, 0)),
        ],
        out_specs=pl.BlockSpec((1, traj, n_node), lambda c: (c, 0, 0)),
        scratch_shapes=[pltpu.VMEM((traj, n_node), jnp.float32)],
        compiler_params=pltpu.CompilerParams(
            dimension_semantics=("arbitrary",),
            vmem_limit_bytes=_vmem_limit_bytes()),
    )(trans, node_obs)


def _random_walk_kernel(steps_ref, t_ref, d_ref, o_ref):
    """Per-prediction random walk: d <- d @ T, repeated steps_ref[p] times.

    Dynamic trip count from the SMEM-prefetched step table (no wasted matvecs).
    T is stored bf16; the distribution carry / accumulation stays f32.
    """
    p = pl.program_id(0)
    n_steps = jnp.maximum(steps_ref[p], 0)

    def body(s, d):
        return jnp.dot(d.astype(t_ref.dtype), t_ref[0],
                       preferred_element_type=jnp.float32)

    o_ref[0] = lax.fori_loop(0, n_steps, body, d_ref[0])


def random_walk_pallas(trans, start_dist, rw_steps):
    """trans: [n_pred, n_node, n_node] (bf16 or f32), start_dist: [n_pred, n_node],
    rw_steps: int32 [n_pred].  Returns [n_pred, n_node] f32."""
    n_pred, n_node, _ = trans.shape
    d0 = start_dist[:, None, :].astype(jnp.float32)  # [n_pred, 1, n_node]
    # TODO(synk): for n_node large enough that 2 * n_node^2 * itemsize exceeds the
    # scoped VMEM limit, tile T over the receiver axis with an inner emit_pipeline
    # instead of relying on whole-matrix double buffering.
    grid_spec = pltpu.PrefetchScalarGridSpec(
        num_scalar_prefetch=1,
        grid=(n_pred,),
        in_specs=[
            pl.BlockSpec((1, n_node, n_node), lambda p, st: (p, 0, 0)),
            pl.BlockSpec((1, 1, n_node), lambda p, st: (p, 0, 0)),
        ],
        out_specs=pl.BlockSpec((1, 1, n_node), lambda p, st: (p, 0, 0)),
    )
    out = pl.pallas_call(
        _random_walk_kernel,
        out_shape=jax.ShapeDtypeStruct((n_pred, 1, n_node), jnp.float32),
        grid_spec=grid_spec,
        compiler_params=pltpu.CompilerParams(
            dimension_semantics=("parallel",),
            vmem_limit_bytes=_vmem_limit_bytes()),
    )(rw_steps.astype(jnp.int32), trans, d0)
    return out[:, 0, :]


# ----------------------------------------------------------------------------
# Plain-JAX glue (graph bookkeeping, gathers, normalization)
# ----------------------------------------------------------------------------

class Graph:
    def __init__(self, senders, receivers, n_node, edges=None, nodes=None):
        self.senders = senders
        self.receivers = receivers
        self.n_node = n_node
        self.n_edge = senders.shape[0]
        self.edges = edges
        self.nodes = nodes


def segment_softmax(edge_w, senders, n_node):
    """Graph.c_weights(): softmax of edge weights over edges sharing a sender."""
    m = jax.ops.segment_max(edge_w, senders, num_segments=n_node)
    e = jnp.exp(edge_w - m[senders])
    s = jax.ops.segment_sum(e, senders, num_segments=n_node)
    return e / s[senders]


def dense_transition(senders, receivers, weights, n_node):
    """weights: [n_edge] (or [n_pred, n_edge]) -> dense [.., n_node, n_node]."""
    # TODO(synk): for large sparse graphs, avoid materializing the dense
    # [n_pred, n_node, n_node] tensor in HBM: build T rows inside the kernels from
    # scalar-prefetched senders/receivers/weights instead.
    if weights.ndim == 1:
        t = jnp.zeros((n_node, n_node), jnp.float32)
        return t.at[senders, receivers].add(weights)
    n_pred = weights.shape[0]
    t = jnp.zeros((n_pred, n_node, n_node), jnp.float32)
    return t.at[:, senders, receivers].add(weights)


class ModelPallas:
    def __init__(self, mlp_params, number_observations, rw_expected_steps,
                 rw_non_backtracking, latent_transformer_see_target,
                 double_way_diffusion, diffusion_self_loops, diffusion_k):
        self.mlp_params = mlp_params
        self.number_observations = number_observations
        self.rw_expected_steps = rw_expected_steps
        self.rw_non_backtracking = rw_non_backtracking  # TODO(synk): non-backtracking walk not implemented (needs line-graph construction)
        self.latent_transformer_see_target = latent_transformer_see_target
        self.double_way_diffusion = double_way_diffusion
        self.diffusion_self_loops = diffusion_self_loops
        self.diffusion_k = diffusion_k

    # --- compute_diffusion ---------------------------------------------------
    def compute_diffusion(self, graph, observations):
        senders, receivers = graph.senders, graph.receivers
        if self.diffusion_self_loops:
            loops = jnp.arange(graph.n_node, dtype=senders.dtype)
            senders = jnp.concatenate([senders, loops])
            receivers = jnp.concatenate([receivers, loops])
        ones = jnp.ones((senders.shape[0],), jnp.float32)
        w = segment_softmax(ones, senders, graph.n_node)  # uniform out-weights
        trans = dense_transition(senders, receivers, w, graph.n_node)
        # diffusion of mass: new[j] = sum_i old[i] * T[i, j]  ->  obs @ T
        # (n_node stays on the lane axis throughout)
        diff = multichannel_diffusion_pallas(trans, observations, self.diffusion_k)
        # virtual_coords: [n_node, traj_length, diffusion_k]
        return jnp.transpose(diff, (2, 1, 0))

    # --- compute_rw_weights --------------------------------------------------
    def compute_rw_weights(self, virtual_coords, observed, pairwise_node_features,
                           targets, graph):
        n_pred = observed.shape[0]
        n_node, n_edge = graph.n_node, graph.n_edge

        # Build witness features directly in lane-dense [f_in, n_edge, n_pred]
        # layout so the MLP kernel never needs a pad or transpose pass.
        diffusions = virtual_coords[:, observed]               # [n_node, n_pred, n_obs, K]
        diffusions = diffusions.reshape(n_node, n_pred, -1)    # [n_node, n_pred, D]
        diff_t = jnp.transpose(diffusions, (2, 0, 1))          # [D, n_node, n_pred]

        feats = [diff_t[:, graph.senders], diff_t[:, graph.receivers]]  # [D, n_edge, n_pred]
        if self.latent_transformer_see_target and pairwise_node_features is not None:
            target_features = pairwise_node_features[targets].T          # [n_node, n_pred]
            feats.append(target_features[graph.senders][None])           # [1, n_edge, n_pred]
            feats.append(target_features[graph.receivers][None])
        if graph.edges is not None:
            e = graph.edges                                               # [n_edge, f_e]
            feats.append(jnp.broadcast_to(e.T[:, :, None],
                                          (e.shape[1], n_edge, n_pred)))

        edge_input_T = jnp.concatenate(feats, axis=0)          # [f_in, n_edge, n_pred]
        f_in = edge_input_T.shape[0]
        edge_input_T = edge_input_T.reshape(f_in, n_edge * n_pred)

        w1, b1, w2, b2 = self.mlp_params
        rw = mlp_pallas(edge_input_T, w1, b1, w2, b2)          # [n_edge*n_pred]
        rw = rw.reshape(n_edge, n_pred)
        return segment_softmax(rw, graph.senders, n_node)      # c_weights()

    # --- compute_random_walk -------------------------------------------------
    def compute_random_walk(self, graph, rw_weights, observations, starts,
                            targets, steps):
        cs = jnp.concatenate(
            [jnp.zeros((1,), steps.dtype), jnp.cumsum(steps, axis=0)])
        rw_steps = cs[targets] - cs[starts]                    # compute_steps()
        start_distributions = observations[starts]             # [n_pred, n_node]
        trans = dense_transition(graph.senders, graph.receivers,
                                 rw_weights.T, graph.n_node)   # [n_pred, n, n]
        # bf16 T halves HBM traffic and the double-buffered per-pred VMEM block;
        # accumulation stays f32 inside the kernel.
        trans = trans.astype(jnp.bfloat16)
        return random_walk_pallas(trans, start_distributions, rw_steps)

    # --- forward --------------------------------------------------------------
    def forward(self, observations, graph, diffusion_graph, observed, starts,
                targets, pairwise_node_features, steps):
        assert observed.shape[0] == starts.shape[0] == targets.shape[0]
        virtual_coords = self.compute_diffusion(diffusion_graph, observations)
        if self.double_way_diffusion:
            rev = Graph(diffusion_graph.receivers, diffusion_graph.senders,
                        diffusion_graph.n_node, diffusion_graph.edges)
            virtual_coords = jnp.concatenate(
                [virtual_coords, self.compute_diffusion(rev, observations)], axis=-1)
        rw_weights = self.compute_rw_weights(
            virtual_coords, observed, pairwise_node_features, targets, graph)
        target_distributions = self.compute_random_walk(
            graph, rw_weights, observations, starts, targets, steps)
        return target_distributions, virtual_coords, rw_weights


# ----------------------------------------------------------------------------
# Main
# ----------------------------------------------------------------------------

if __name__ == "__main__":
    key = jax.random.PRNGKey(0)

    # small problem sizes
    n_node = 8
    traj_length = 6
    n_pred = 3
    number_observations = 2
    diffusion_k = 4

    # directed ring graph in both directions -> every node has out-degree 2
    senders_np = np.concatenate([np.arange(n_node), np.arange(n_node)])
    receivers_np = np.concatenate([(np.arange(n_node) + 1) % n_node,
                                   (np.arange(n_node) - 1) % n_node])
    n_edge = senders_np.shape[0]
    senders = jnp.asarray(senders_np, jnp.int32)
    receivers = jnp.asarray(receivers_np, jnp.int32)
    graph = Graph(senders, receivers, n_node,
                  edges=jnp.ones((n_edge, 1), jnp.float32), nodes=None)
    diffusion_graph = Graph(senders, receivers, n_node)

    # observations: one-hot node distributions along the trajectory
    obs_nodes = np.array([0, 1, 2, 3, 4, 5]) % n_node
    observations = jnp.asarray(np.eye(n_node, dtype=np.float32)[obs_nodes])  # [traj, n_node]

    observed_np = np.array([[0, 1], [1, 2], [2, 3]], np.int32)               # [n_pred, n_obs]
    starts_np = np.array([1, 2, 3], np.int32)
    targets_np = np.array([3, 4, 5], np.int32)
    steps_np = np.ones((traj_length - 1,), np.int32)                          # consecutive distances
    observed = jnp.asarray(observed_np)
    starts = jnp.asarray(starts_np)
    targets = jnp.asarray(targets_np)
    steps = jnp.asarray(steps_np)

    key, k1 = jax.random.split(key)
    pairwise_node_features = jax.random.normal(k1, (n_node, n_node), jnp.float32)

    # direction_edge_mlp parameters (deterministic init)
    f_in = 2 * number_observations * diffusion_k + 2 + 1   # sender/receiver diff + target feats + edge feat
    f_hidden = 4 * f_in
    f_out = 1
    key, kw1, kb1, kw2, kb2 = jax.random.split(key, 5)
    w1 = jax.random.normal(kw1, (f_in, f_hidden), jnp.float32) / np.sqrt(f_in)
    b1 = jax.random.normal(kb1, (1, f_hidden), jnp.float32) * 0.01
    w2 = jax.random.normal(kw2, (f_hidden, f_out), jnp.float32) / np.sqrt(f_hidden)
    b2 = jax.random.normal(kb2, (1, f_out), jnp.float32) * 0.01

    model = ModelPallas(
        mlp_params=(w1, b1, w2, b2),
        number_observations=number_observations,
        rw_expected_steps=True,
        rw_non_backtracking=False,
        latent_transformer_see_target=True,
        double_way_diffusion=False,
        diffusion_self_loops=True,
        diffusion_k=diffusion_k,
    )

    target_distributions, virtual_coords, rw_weights = model.forward(
        observations, graph, diffusion_graph, observed, starts, targets,
        pairwise_node_features, steps)

    jax.block_until_ready((target_distributions, virtual_coords, rw_weights))

    assert target_distributions.shape == (n_pred, n_node)
    assert virtual_coords.shape == (n_node, traj_length, diffusion_k)
    assert rw_weights.shape == (n_edge, n_pred)
    assert np.all(np.isfinite(np.asarray(target_distributions)))
    assert np.all(np.isfinite(np.asarray(rw_weights)))
    # random walk of a probability distribution stays a probability distribution
    # (bf16 transition matrices -> loosened tolerance)
    np.testing.assert_allclose(
        np.asarray(target_distributions).sum(-1), np.ones(n_pred),
        rtol=0.0, atol=2e-2)

    print("KERNEL_OK")
</pallas_src>

<mosaic_0001>
module attributes {stable_mosaic.version = 11 : i64} {
  func.func @_diffusion_kernel(%arg0: i32, %arg1: memref<8x8xf32, #tpu.memory_space<vmem>>, %arg2: memref<6x8xf32, #tpu.memory_space<vmem>>, %arg3: memref<1x6x8xf32, #tpu.memory_space<vmem>>, %arg4: memref<6x8xf32, #tpu.memory_space<vmem>>) attributes {dimension_semantics = [#tpu.dimension_semantics<arbitrary>], iteration_bounds = array<i64: 4>, scalar_prefetch = 0 : i64, scratch_operands = 1 : i64, tpu.core_type = #tpu.core_type<tc>, window_params = [{pipeline_mode = #tpu.pipeline_mode<synchronous>, transform_indices = @transform_0, window_bounds = array<i64: 8, 8>}, {pipeline_mode = #tpu.pipeline_mode<synchronous>, transform_indices = @transform_1, window_bounds = array<i64: 6, 8>}, {transform_indices = @transform_2, window_bounds = array<i64: 1, 6, 8>}]} {
    %c0_i32 = arith.constant 0 : i32
    %0 = arith.cmpi eq, %arg0, %c0_i32 : i32
    %1 = arith.extui %0 : i1 to i32
    %c0_i32_0 = arith.constant 0 : i32
    %2 = arith.cmpi ne, %1, %c0_i32_0 : i32
    scf.if %2 {
      %c0_9 = arith.constant 0 : index
      %c0_10 = arith.constant 0 : index
      %10 = vector.load %arg2[%c0_9, %c0_10] : memref<6x8xf32, #tpu.memory_space<vmem>>, vector<6x8xf32>
      %c0_11 = arith.constant 0 : index
      %c0_12 = arith.constant 0 : index
      %11 = vector.load %arg4[%c0_11, %c0_12] : memref<6x8xf32, #tpu.memory_space<vmem>>, vector<6x8xf32>
      tpu.vector_store %arg4[%c0_11, %c0_12], %10 {strides = array<i32>} : memref<6x8xf32, #tpu.memory_space<vmem>>, vector<6x8xf32>,
    } else {
    }
    %c0 = arith.constant 0 : index
    %c0_1 = arith.constant 0 : index
    %3 = vector.load %arg4[%c0, %c0_1] : memref<6x8xf32, #tpu.memory_space<vmem>>, vector<6x8xf32>
    %c0_2 = arith.constant 0 : index
    %c0_3 = arith.constant 0 : index
    %4 = vector.load %arg1[%c0_2, %c0_3] : memref<8x8xf32, #tpu.memory_space<vmem>>, vector<8x8xf32>
    %cst = arith.constant dense<0.000000e+00> : vector<6x8xf32>
    %5 = tpu.matmul %3, %4, %cst {dimension_numbers = #tpu.dot_dimension_numbers<[1], [0], [0], [1], [0, 0, 1, 1], [], []>} : vector<6x8xf32>, vector<8x8xf32>, vector<6x8xf32> -> vector<6x8xf32>
    %c0_4 = arith.constant 0 : index
    %c0_5 = arith.constant 0 : index
    %6 = vector.load %arg4[%c0_4, %c0_5] : memref<6x8xf32, #tpu.memory_space<vmem>>, vector<6x8xf32>
    tpu.vector_store %arg4[%c0_4, %c0_5], %5 {strides = array<i32>} : memref<6x8xf32, #tpu.memory_space<vmem>>, vector<6x8xf32>,
    %c0_6 = arith.constant 0 : index
    %c0_7 = arith.constant 0 : index
    %c0_8 = arith.constant 0 : index
    %7 = vector.load %arg3[%c0_6, %c0_7, %c0_8] : memref<1x6x8xf32, #tpu.memory_space<vmem>>, vector<1x6x8xf32>
    %8 = vector.shape_cast %7 : vector<1x6x8xf32> to vector<6x8xf32>
    %9 = vector.shape_cast %5 : vector<6x8xf32> to vector<1x6x8xf32>
    tpu.vector_store %arg3[%c0_6, %c0_7, %c0_8], %9 {strides = array<i32>} : memref<1x6x8xf32, #tpu.memory_space<vmem>>, vector<1x6x8xf32>,
    return
  }
  func.func @transform_0(%arg0: i32) -> (i32, i32) {
    %c0_i32 = arith.constant 0 : i32
    %c0_i32_0 = arith.constant 0 : i32
    %c0_i32_1 = arith.constant 0 : i32
    return %c0_i32, %c0_i32_0 : i32, i32
  }
  func.func @transform_1(%arg0: i32) -> (i32, i32) {
    %c0_i32 = arith.constant 0 : i32
    %c0_i32_0 = arith.constant 0 : i32
    %c0_i32_1 = arith.constant 0 : i32
    return %c0_i32, %c0_i32_0 : i32, i32
  }
  func.func @transform_2(%arg0: i32) -> (i32, i32, i32) {
    %c0_i32 = arith.constant 0 : i32
    %c0_i32_0 = arith.constant 0 : i32
    %c0_i32_1 = arith.constant 0 : i32
    return %arg0, %c0_i32, %c0_i32_0 : i32, i32, i32
  }
}

</mosaic_0001>

<llo_original>
// kernel: tpu_custom_call.1
$region0: #{tpu_custom_call.1}
  #allocation0 [shape = 'u32[]', space=smem, size = 0x4, offset = 0x4, fixed_abs, tag = 'smem constant byte address 0x4 - core index']
  #allocation1 [shape = 'u32[144,128]{1,0:T(1,128)}', space=vmem, size = 0x12000, scoped, tag = 'internal scratch']
  #allocation2 [shape = 'f32[6,8]{1,0:T(8,128)}', space=vmem, size = 0x1000, scoped, tag = 'scratch operand']
  %s0 = inlined_call_operand.hbm [shape: f32[8,8], index: 0, kind: input, shape index: {}]
  %s1 = inlined_call_operand.hbm [shape: f32[6,8], index: 1, kind: input, shape index: {}]
  %s2 = inlined_call_operand.vmem [shape: f32[4,6,8], index: 2, kind: output, shape index: {}]
  %s3 = sld [smem:[#allocation0]]
  $region53: #{tpu_custom_call.1} parent=0
    _
  %s5 = ssub.s32 1, %s3
  %s6 = scalar_select 0, %s5, %s3
  $region1: #{tpu_custom_call.1} parent=0
    #allocation3 [shape = 'u8[4096]{0}', space=vmem, size = 0x1000, scoped, tag = 'input window, operand 0, single buffered']
    #allocation4 [shape = 's32[2]{0}', space=sflag, size = 0x8, scoped, tag = 'scoped memory for tpu_custom_call.1']
    #allocation5 [shape = 'u8[4096]{0}', space=vmem, size = 0x1000, scoped, tag = 'input window, operand 1, single buffered']
    #allocation6 [shape = 's32[1]{0}', space=sflag, size = 0x4, scoped, tag = 'scoped memory for tpu_custom_call.1']
    %7 = vsyncpa [#allocation4], 0
    %8 = vsyncpa [#allocation6], 0
    loop: start=0, step=1, limit=6
    $region2: #{tpu_custom_call.1} parent=1 // loop_pre_header
      _
    $region3: #{tpu_custom_call.1} parent=1 // loop_header
      %s10 = sphi 0, %s14
      %p11 = scmp.ge.s32.totalorder %s10, 6
      %s18 = sphi 0, %s18
      %s20 = sphi 0, %s18
      %s21 = sphi 0, %s20
      %s35 = sphi 0, %s21
      %s39 = sphi 0, %s39
      %s41 = sphi 0, %s39
      %s42 = sphi 0, %s41
      %s56 = sphi 0, %s42
      %s62 = sphi 0, %s64
      %s65 = sphi 0, %s62
      %s66 = sphi 0, %s65
      %s82 = sphi 0, %s66
    $region4: #{tpu_custom_call.1} parent=1 // loop_header_branch
      %13 = sbr.rel (%p11) target = $region8
    $region5: #{tpu_custom_call.1} parent=1 // loop_body
      %s15 = ssub.s32 %s10, 1
      %s16 = ssub.s32 %s10, 2
      %s17 = sadd.s32 %s10, 1
      %s19 = sadd.s32 %s18, 1
      %p22 = scmp.eq.s32.totalorder %s10, 3
      %p23 = scmp.ne.s32.totalorder %s18, %s20
      %p24 = scmp.eq.s32.totalorder %s10, 0
      %p25 = por %p23, %p24
      %p26 = scmp.ne.s32.totalorder %s18, %s20
      %p27 = scmp.eq.s32.totalorder %s15, 3
      %p28 = por %p26, %p27
      %p29 = scmp.ne.s32.totalorder %s20, %s21
      %p30 = scmp.eq.s32.totalorder %s15, 0
      %p31 = por %p29, %p30
      %p32 = scmp.ne.s32.totalorder %s20, %s21
      %p33 = scmp.eq.s32.totalorder %s16, 3
      %p34 = por %p32, %p33
      %p36 = scmp.ne.s32.totalorder %s21, %s35
      %p37 = scmp.eq.s32.totalorder %s16, 0
      %p38 = por %p36, %p37
      %s40 = sadd.s32 %s39, 1
      %p43 = scmp.eq.s32.totalorder %s10, 3
      %p44 = scmp.ne.s32.totalorder %s39, %s41
      %p45 = scmp.eq.s32.totalorder %s10, 0
      %p46 = por %p44, %p45
      %p47 = scmp.ne.s32.totalorder %s39, %s41
      %p48 = scmp.eq.s32.totalorder %s15, 3
      %p49 = por %p47, %p48
      %p50 = scmp.ne.s32.totalorder %s41, %s42
      %p51 = scmp.eq.s32.totalorder %s15, 0
      %p52 = por %p50, %p51
      %p53 = scmp.ne.s32.totalorder %s41, %s42
      %p54 = scmp.eq.s32.totalorder %s16, 3
      %p55 = por %p53, %p54
      %p57 = scmp.ne.s32.totalorder %s42, %s56
      %p58 = scmp.eq.s32.totalorder %s16, 0
      %p59 = por %p57, %p58
      %s60 = ssub.s32 %s10, %s17
      %p61 = scmp.eq.s32.totalorder %s60, 0
      %s63 = sadd.s32 %s62, 1
      %s64 = scalar_select %p61, %s62, %s63
      %p67 = pneg %p61
      %p68 = scmp.eq.s32.totalorder %s10, 3
      %p69 = por %p67, %p68
      %p70 = scmp.ne.s32.totalorder %s62, %s65
      %p71 = scmp.eq.s32.totalorder %s10, 0
      %p72 = por %p70, %p71
      %p73 = scmp.ne.s32.totalorder %s62, %s65
      %p74 = scmp.eq.s32.totalorder %s15, 3
      %p75 = por %p73, %p74
      %p76 = scmp.ne.s32.totalorder %s65, %s66
      %p77 = scmp.eq.s32.totalorder %s15, 0
      %p78 = por %p76, %p77
      %p79 = scmp.ne.s32.totalorder %s65, %s66
      %p80 = scmp.eq.s32.totalorder %s16, 3
      %p81 = por %p79, %p80
      %p83 = scmp.ne.s32.totalorder %s66, %s82
      %p84 = scmp.eq.s32.totalorder %s16, 0
      %p85 = por %p83, %p84
      %p86 = scmp.le.s32.totalorder 1, %s10
      %p87 = scmp.lt.s32.totalorder %s10, 5
      %p88 = pnand %p86, %p87
      %p89 = pneg %p88
      // Predicated region
      $region9: #{tpu_custom_call.1} parent=5 // pred_check
        _
      $region10: #{tpu_custom_call.1} parent=5 // pred_check_branch
        %91 = sbr.rel (%p88) target = $region12
      $region11: #{tpu_custom_call.1} parent=5 // pred_region
        %s92 = ssub.s32 %s10, 1
        // Predicated region
        $region13: #{tpu_custom_call.1} parent=11 // pred_check
          %p93 = pneg %p31
        $region14: #{tpu_custom_call.1} parent=11 // pred_check_branch
          %95 = sbr.rel (%p93) target = $region16
        $region15: #{tpu_custom_call.1} parent=11 // pred_region
          %s97 = ssub.s32 128, 128
          %98 = vsyncadd [#allocation4], %s97
          %s100 = sshll.u32 [#allocation3], 4
          %s101 = int_to_ptr.vmem [resolvable:$true] %s100
          %103 = dma.hbm_to_vmem [thread:$0]  %s0, 128, %s101, [#allocation4]
        $region16: #{tpu_custom_call.1} parent=11 // pred_fallthru
          _
        // Predicated region
        $region17: #{tpu_custom_call.1} parent=11 // pred_check
          %p104 = pneg %p52
        $region18: #{tpu_custom_call.1} parent=11 // pred_check_branch
          %106 = sbr.rel (%p104) target = $region20
        $region19: #{tpu_custom_call.1} parent=11 // pred_region
          %s108 = ssub.s32 128, 128
          %109 = vsyncadd [#allocation6], %s108
          %s111 = sshll.u32 [#allocation5], 4
          %s112 = int_to_ptr.vmem [resolvable:$true] %s111
          %114 = dma.hbm_to_vmem [thread:$0]  %s1, 128, %s112, [#allocation6]
        $region20: #{tpu_custom_call.1} parent=11 // pred_fallthru
          _
      $region12: #{tpu_custom_call.1} parent=5 // pred_fallthru
        _
      %p115 = scmp.lt.s32.totalorder %s10, 4
      // Predicated region
      $region21: #{tpu_custom_call.1} parent=5 // pred_check
        %p116 = pneg %p115
      $region22: #{tpu_custom_call.1} parent=5 // pred_check_branch
        %118 = sbr.rel (%p116) target = $region24
      $region23: #{tpu_custom_call.1} parent=5 // pred_region
        _
      $region24: #{tpu_custom_call.1} parent=5 // pred_fallthru
        _
      %p119 = scmp.le.s32.totalorder 1, %s10
      %p120 = scmp.lt.s32.totalorder %s10, 5
      %p121 = pnand %p119, %p120
      %p122 = pneg %p121
      // Predicated region
      $region25: #{tpu_custom_call.1} parent=5 // pred_check
        _
      $region26: #{tpu_custom_call.1} parent=5 // pred_check_branch
        %124 = sbr.rel (%p121) target = $region28
      $region27: #{tpu_custom_call.1} parent=5 // pred_region
        %s125 = ssub.s32 %s10, 1
        // Predicated region
        $region29: #{tpu_custom_call.1} parent=27 // pred_check
          %p126 = pneg %p31
        $region30: #{tpu_custom_call.1} parent=27 // pred_check_branch
          %128 = sbr.rel (%p126) target = $region32
        $region31: #{tpu_custom_call.1} parent=27 // pred_region
          %129 = dma.done [#allocation4], 128
        $region32: #{tpu_custom_call.1} parent=27 // pred_fallthru
          _
        // Predicated region
        $region33: #{tpu_custom_call.1} parent=27 // pred_check
          %p130 = pneg %p52
        $region34: #{tpu_custom_call.1} parent=27 // pred_check_branch
          %132 = sbr.rel (%p130) target = $region36
        $region35: #{tpu_custom_call.1} parent=27 // pred_region
          %133 = dma.done [#allocation6], 128
        $region36: #{tpu_custom_call.1} parent=27 // pred_fallthru
          _
        %p134 = pneg %p31
        %p135 = pneg %p28
        %p136 = pneg %p52
        %p137 = pneg %p49
        %p138 = pneg %p78
        %p139 = pneg %p75
        %p140 = scmp.lt.s32.totalorder %s15, 3
        %s141 = scalar_select %p140, %s15, 3
        %s142 = smul.addr %s141, 8
        %s143 = scalar_lea.vmem %s2, %s142
        %p144 = scmp.lt.s32.totalorder %s15, 3
        %s145 = scalar_select %p144, %s15, 3
        %s146 = smul.addr %s145, 8
        %s147 = scalar_lea.vmem %s2, %s146
        %p148 = scmp.eq.s32.totalorder %s15, 0
        // Predicated region
        $region37: #{tpu_custom_call.1} parent=27 // pred_check
          %p149 = pneg %p148
        $region38: #{tpu_custom_call.1} parent=27 // pred_check_branch
          %151 = sbr.rel (%p149) target = $region40
        $region39: #{tpu_custom_call.1} parent=27 // pred_region
          %v152 = vld [vmem:[#allocation5] sm:$0x3f]
          %vm153 = vcmask 62464
          %154 = vst.msk [vmem:[#allocation2] sm:$0x3f] %vm153, %v152
        $region40: #{tpu_custom_call.1} parent=27 // pred_fallthru
          _
        %v155 = vld [vmem:[#allocation2] sm:$0x3f]
        %v156 = vld [vmem:[#allocation3] sm:$0xff]
        %vm157 = vcmask 64512
        %v159 = vsel %vm157, %v155, 0
        %161 = vmatprep.subr.mxu0 0.0
        %162 = vmatpush1.msra.mxu0 0.0
        %163 = vmatprep.subr.mxu0 0.0
        %164 = vmatpush1.msra.mxu0 0.0
        %165 = vmatprep.subr.mxu0 0.0
        %166 = vmatpush1.msra.mxu0 0.0
        %167 = vmatprep.subr.mxu0 0.0
        %168 = vmatpush1.msra.mxu0 0.0
        %169 = vmatprep.subr.mxu0 0.0
        %170 = vmatpush1.msra.mxu0 0.0
        %171 = vmatprep.subr.mxu0 0.0
        %172 = vmatpush1.msra.mxu0 0.0
        %173 = vmatprep.subr.mxu0 0.0
        %174 = vmatpush1.msra.mxu0 0.0
        %175 = vmatprep.subr.mxu0 0.0
        %176 = vmatpush1.msra.mxu0 0.0
        %177 = vmatprep.subr.mxu0 0.0
        %178 = vmatpush1.msra.mxu0 0.0
        %179 = vmatprep.subr.mxu0 0.0
        %180 = vmatpush1.msra.mxu0 0.0
        %181 = vmatprep.subr.mxu0 0.0
        %182 = vmatpush1.msra.mxu0 0.0
        %183 = vmatprep.subr.mxu0 0.0
        %184 = vmatpush1.msra.mxu0 0.0
        %185 = vmatprep.subr.mxu0 0.0
        %186 = vmatpush1.msra.mxu0 0.0
        %187 = vmatprep.subr.mxu0 0.0
        %188 = vmatpush1.msra.mxu0 0.0
        %189 = vmatprep.subr.mxu0 0.0
        %190 = vmatpush1.msra.mxu0 0.0
        %191 = vmatprep.subr.mxu0 0.0
        %192 = vmatpush1.msra.mxu0 %v156
        %193 = vmatprep.subr.mxu0 0.0
        %194 = vmatpush2.msra.mxu0 0.0
        %195 = vmatprep.subr.mxu0 0.0
        %196 = vmatpush2.msra.mxu0 0.0
        %197 = vmatprep.subr.mxu0 0.0
        %198 = vmatpush2.msra.mxu0 0.0
        %199 = vmatprep.subr.mxu0 0.0
        %200 = vmatpush2.msra.mxu0 0.0
        %201 = vmatprep.subr.mxu0 0.0
        %202 = vmatpush2.msra.mxu0 0.0
        %203 = vmatprep.subr.mxu0 0.0
        %204 = vmatpush2.msra.mxu0 0.0
        %205 = vmatprep.subr.mxu0 0.0
        %206 = vmatpush2.msra.mxu0 0.0
        %207 = vmatprep.subr.mxu0 0.0
        %208 = vmatpush2.msra.mxu0 0.0
        %209 = vmatprep.subr.mxu0 0.0
        %210 = vmatpush2.msra.mxu0 0.0
        %211 = vmatprep.subr.mxu0 0.0
        %212 = vmatpush2.msra.mxu0 0.0
        %213 = vmatprep.subr.mxu0 0.0
        %214 = vmatpush2.msra.mxu0 0.0
        %215 = vmatprep.subr.mxu0 0.0
        %216 = vmatpush2.msra.mxu0 0.0
        %217 = vmatprep.subr.mxu0 0.0
        %218 = vmatpush2.msra.mxu0 0.0
        %219 = vmatprep.subr.mxu0 0.0
        %220 = vmatpush2.msra.mxu0 0.0
        %221 = vmatprep.subr.mxu0 0.0
        %222 = vmatpush2.msra.mxu0 0.0
        %223 = vmatprep.subr.mxu0 0.0
        %224 = vmatpush2.msra.mxu0 0.0
        %225 = vmatprep.mubr.f32.mxu0 0.0
        %226 = vmatmul.mubr.f32.gmra.mxu0 %v159
        %v227 = vpop.f32.mrf.mxu0
        %v228 = vadd.f32 0.0, %v227
        %v229 = vpop.f32.mrf.mxu0
        %230 = vdwg.mxu0
        %vm231 = vcmask 62464
        %232 = vst.msk [vmem:[#allocation2] sm:$0x3f] %vm231, %v228
        %233 = vst.msk [vmem:[%s147] sm:$0x3f] %vm231, %v228
        %p234 = scmp.lt.s32.totalorder %s15, 3
        %s235 = scalar_select %p234, %s15, 3
        %s236 = smul.addr %s235, 8
        %s237 = scalar_lea.vmem %s2, %s236
        // Predicated region
        $region41: #{tpu_custom_call.1} parent=27 // pred_check
          %p238 = pneg %p75
        $region42: #{tpu_custom_call.1} parent=27 // pred_check_branch
          %240 = sbr.rel (%p238) target = $region44
        $region43: #{tpu_custom_call.1} parent=27 // pred_region
          _
        $region44: #{tpu_custom_call.1} parent=27 // pred_fallthru
          _
      $region28: #{tpu_custom_call.1} parent=5 // pred_fallthru
        _
      %p241 = scmp.le.s32.totalorder 2, %s10
      // Predicated region
      $region45: #{tpu_custom_call.1} parent=5 // pred_check
        %p242 = pneg %p241
      $region46: #{tpu_custom_call.1} parent=5 // pred_check_branch
        %244 = sbr.rel (%p242) target = $region48
      $region47: #{tpu_custom_call.1} parent=5 // pred_region
        %s245 = ssub.s32 %s10, 2
        // Predicated region
        $region49: #{tpu_custom_call.1} parent=47 // pred_check
          %p246 = pneg %p81
        $region50: #{tpu_custom_call.1} parent=47 // pred_check_branch
          %248 = sbr.rel (%p246) target = $region52
        $region51: #{tpu_custom_call.1} parent=47 // pred_region
          %p249 = scmp.lt.s32.totalorder %s16, 3
          %s250 = scalar_select %p249, %s16, 3
          %s251 = smul.addr %s250, 8
          %s252 = scalar_lea.vmem %s2, %s251
        $region52: #{tpu_custom_call.1} parent=47 // pred_fallthru
          _
      $region48: #{tpu_custom_call.1} parent=5 // pred_fallthru
        _
    $region6: #{tpu_custom_call.1} parent=1 // loop_footer
      %s14 = sadd.s32 1, %s10
    $region7: #{tpu_custom_call.1} parent=1 // loop_footer_branch
      %9 = sbr.rel target = $region3
    $region8: #{tpu_custom_call.1} parent=1 // loop_exit
      _
    %253 = vsyncpa [#allocation4], 1
    %s254 = scalar_lea.sflag [#allocation4], 1
    %255 = vsyncpa %s254, 1
    %256 = vsyncpa [#allocation6], 1

</llo_original>
